<compile_context>
chip_gen: v7x
topology: tpu7x:2x2x1
jax: 0.10.0
libtpu: 0.0.40
codegen_flags: <defaults>
</compile_context>

<pallas_src>
import functools

import jax
import jax.numpy as jnp
from jax.experimental import pallas as pl
from jax.experimental.pallas import tpu as pltpu

EPS = 1e-8
_T_TILE_MAX = 32768          # caps the unrolled 128-lane group loop (trace size)


def _round_up(x, m):
    return ((x + m - 1) // m) * m


def _min_sublanes(dtype):
    # f32 tiles are (8,128); bf16 packs 16 rows per vreg, int8/fp8 pack 32.
    itemsize = jnp.dtype(dtype).itemsize
    return max(8, 32 // itemsize)


def _vmem_budget_bytes():
    """Generation-aware VMEM budget (headroom left for compiler scratch)."""
    cap = None
    try:
        cap = getattr(pltpu.get_tpu_info(), "vmem_capacity_bytes", None)
    except Exception:
        cap = None
    if not cap:
        cap = 64 * 1024 * 1024            # conservative fallback: v7x physical
    return int(min(cap * 3 // 4, 96 * 1024 * 1024))


def _choose_tiles(B, T, in_bytes_per_col, min_rows, budget):
    """Pick (batch_tile, t_tile): prefer full-T residency, then big batch tiles."""
    T128 = _round_up(T, 128)
    B_rows = _round_up(B, min_rows)

    # Keep >=2 blocks on the "parallel" batch axis when B allows it, so both
    # TensorCores are used on dual-core chips (near-free on single-core).
    if B >= 2 * min_rows:
        bt_cap = _round_up(-(-B // 2), min_rows)
    else:
        bt_cap = B_rows

    t_tile = min(T128, _T_TILE_MAX)

    # VMEM bytes per batch row at a given t_tile: double-buffered input blocks
    # + lane-wide accumulators + shift scratch + output block + an allowance
    # for in-flight (batch_tile, 128) f32 temporaries.
    fixed = (5 * 128 + 2) * 4 + 2 * 4 + 8 * 128 * 4

    def per_row(tt):
        return 2 * tt * in_bytes_per_col + fixed

    bt_fit = (budget // per_row(t_tile)) // min_rows * min_rows
    bt = min(bt_cap, max(min_rows, bt_fit))
    if per_row(t_tile) * bt > budget:
        # even min_rows rows do not fit at full-T -> shrink the time tile.
        bt = min_rows
        tt_fit = (budget // bt - fixed) // (2 * in_bytes_per_col)
        t_tile = max(128, min(t_tile, tt_fit // 128 * 128))
    return bt, t_tile


def _negpearson_kernel(p_ref, g_ref, cos_ref,
                       sp_ref, sg_ref, spg_ref, spp_ref, sgg_ref,
                       cp_ref, cg_ref,
                       *, t_true, t_tile, t_grid, inv_t, batch_tile):
    k = pl.program_id(1)

    # Reset the lane-wide accumulators and capture the per-row shift at the
    # start of each row-tile's time sweep.
    @pl.when(k == 0)
    def _():
        sp_ref[...] = jnp.zeros_like(sp_ref)
        sg_ref[...] = jnp.zeros_like(sg_ref)
        spg_ref[...] = jnp.zeros_like(spg_ref)
        spp_ref[...] = jnp.zeros_like(spp_ref)
        sgg_ref[...] = jnp.zeros_like(sgg_ref)
        cp_ref[...] = p_ref[:, 0:1].astype(jnp.float32)
        cg_ref[...] = g_ref[:, 0:1].astype(jnp.float32)

    groups = t_tile // 128
    # Hoisted broadcasts / iota (JAX does not CSE broadcast_in_dim in loops).
    cp = jnp.broadcast_to(cp_ref[...], (batch_tile, 128))
    cg = jnp.broadcast_to(cg_ref[...], (batch_tile, 128))
    lane = jax.lax.broadcasted_iota(jnp.int32, (batch_tile, 128), 1)

    if t_grid == 1:
        last_block_valid = t_true            # k is always 0 -> static bases
        dyn_base = None
    else:
        last_block_valid = t_true - (t_grid - 1) * t_tile
        dyn_base = k * t_tile

    def group_threshold(j):
        # None if lane group j is fully valid for every time step; otherwise a
        # "number of valid lanes" threshold (>=128 for non-tail steps).
        if (j + 1) * 128 <= last_block_valid:
            return None
        if dyn_base is None:
            return last_block_valid - j * 128          # static int
        return t_true - (dyn_base + j * 128)           # traced scalar

    # Stream the block one 128-lane group at a time: temporaries stay at
    # (batch_tile, 128) and all per-step reductions are dense VPU adds.
    for j in range(groups):
        sl = slice(j * 128, (j + 1) * 128)
        pj = p_ref[:, sl].astype(jnp.float32) - cp
        gj = g_ref[:, sl].astype(jnp.float32) - cg
        thr = group_threshold(j)
        if thr is not None:
            valid = lane < thr
            pj = jnp.where(valid, pj, 0.0)
            gj = jnp.where(valid, gj, 0.0)
        sp_ref[...] += pj
        sg_ref[...] += gj
        spg_ref[...] += pj * gj
        spp_ref[...] += pj * pj
        sgg_ref[...] += gj * gj

    # Finalize: single cross-lane (XLU) reduction per row-tile, then cosine.
    @pl.when(k == pl.num_programs(1) - 1)
    def _():
        sp = jnp.sum(sp_ref[...], axis=1, keepdims=True)
        sg = jnp.sum(sg_ref[...], axis=1, keepdims=True)
        spg = jnp.sum(spg_ref[...], axis=1, keepdims=True)
        spp = jnp.sum(spp_ref[...], axis=1, keepdims=True)
        sgg = jnp.sum(sgg_ref[...], axis=1, keepdims=True)
        dot = spg - sp * sg * inv_t
        pp = spp - sp * sp * inv_t
        gg = sgg - sg * sg * inv_t
        # PyTorch CosineSimilarity clamps each norm with eps.
        pn = jnp.maximum(jnp.sqrt(jnp.maximum(pp, 0.0)), EPS)
        gn = jnp.maximum(jnp.sqrt(jnp.maximum(gg, 0.0)), EPS)
        cos_ref[...] = dot / (pn * gn)


def neg_pearson(predictions, ground_truths):
    # Match the PyTorch squeeze(-1) behavior for 3-D inputs.
    if predictions.ndim != 2:
        predictions = jnp.squeeze(predictions, axis=-1)
    if ground_truths.ndim != 2:
        ground_truths = jnp.squeeze(ground_truths, axis=-1)
    assert predictions.shape == ground_truths.shape
    B, T = predictions.shape

    min_rows = max(_min_sublanes(predictions.dtype),
                   _min_sublanes(ground_truths.dtype))
    in_bytes_per_col = (jnp.dtype(predictions.dtype).itemsize
                        + jnp.dtype(ground_truths.dtype).itemsize)

    vmem_limit = _vmem_budget_bytes()
    tile_budget = max(vmem_limit - 2 * 1024 * 1024, 4 * 1024 * 1024)
    batch_tile, t_tile = _choose_tiles(B, T, in_bytes_per_col, min_rows,
                                       tile_budget)

    grid = (pl.cdiv(B, batch_tile), pl.cdiv(T, t_tile))
    kernel = functools.partial(
        _negpearson_kernel,
        t_true=T, t_tile=t_tile, t_grid=grid[1],
        inv_t=1.0 / float(T), batch_tile=batch_tile)

    cos = pl.pallas_call(
        kernel,
        out_shape=jax.ShapeDtypeStruct((B, 1), jnp.float32),
        grid_spec=pltpu.PrefetchScalarGridSpec(
            num_scalar_prefetch=0,
            grid=grid,
            in_specs=[
                pl.BlockSpec((batch_tile, t_tile), lambda i, k: (i, k)),
                pl.BlockSpec((batch_tile, t_tile), lambda i, k: (i, k)),
            ],
            # Output block index is constant over k -> resident per row-tile;
            # rows past B in the last batch block are dropped at writeback.
            out_specs=pl.BlockSpec((batch_tile, 1), lambda i, k: (i, 0)),
            scratch_shapes=(
                [pltpu.VMEM((batch_tile, 128), jnp.float32)] * 5
                + [pltpu.VMEM((batch_tile, 1), jnp.float32)] * 2),
        ),
        compiler_params=pltpu.CompilerParams(
            dimension_semantics=("parallel", "arbitrary"),
            vmem_limit_bytes=int(vmem_limit),
        ),
    )(predictions, ground_truths)

    # Tiny final reduction over the true batch rows.
    return jnp.mean(1.0 - cos)


def _reference(predictions, ground_truths):
    # Pure-JAX reference mirroring the PyTorch module.
    if predictions.ndim != 2:
        predictions = jnp.squeeze(predictions, axis=-1)
    if ground_truths.ndim != 2:
        ground_truths = jnp.squeeze(ground_truths, axis=-1)
    p = predictions - predictions.mean(axis=1, keepdims=True)
    g = ground_truths - ground_truths.mean(axis=1, keepdims=True)
    pn = jnp.maximum(jnp.linalg.norm(p, axis=1), EPS)
    gn = jnp.maximum(jnp.linalg.norm(g, axis=1), EPS)
    cos = jnp.sum(p * g, axis=1) / (pn * gn)
    return jnp.mean(-cos + 1.0)


if __name__ == "__main__":
    key = jax.random.PRNGKey(0)
    k1, k2, k3, k4, k5, k6 = jax.random.split(key, 6)

    # Case 1: small aligned shapes; 3-D path for preds, 2-D path for gts.
    B, T = 16, 128
    preds = jax.random.normal(k1, (B, T, 1), dtype=jnp.float32)
    gts = jax.random.normal(k2, (B, T), dtype=jnp.float32)
    loss = neg_pearson(preds, gts)
    jax.block_until_ready(loss)
    ref = _reference(preds, gts)
    assert jnp.allclose(loss, ref, atol=1e-4, rtol=1e-4), (loss, ref)

    # Case 2: odd shapes exercising partial edge blocks (no wrapper padding).
    B2, T2 = 37, 1000
    preds2 = jax.random.normal(k3, (B2, T2), dtype=jnp.float32)
    gts2 = jax.random.normal(k4, (B2, T2, 1), dtype=jnp.float32)
    loss2 = neg_pearson(preds2, gts2)
    jax.block_until_ready(loss2)
    ref2 = _reference(preds2, gts2)
    assert jnp.allclose(loss2, ref2, atol=1e-4, rtol=1e-4), (loss2, ref2)

    # Case 3: nonzero row means (exercises the cancellation-guard shift).
    B3, T3 = 24, 517
    base = 50.0 + 10.0 * jax.random.normal(k5, (B3, 1), dtype=jnp.float32)
    preds3 = base + jax.random.normal(k6, (B3, T3), dtype=jnp.float32)
    gts3 = base + 0.5 * preds3 + jax.random.normal(k2, (B3, T3), dtype=jnp.float32)
    loss3 = neg_pearson(preds3, gts3)
    jax.block_until_ready(loss3)
    ref3 = _reference(preds3, gts3)
    assert jnp.allclose(loss3, ref3, atol=1e-3, rtol=1e-3), (loss3, ref3)

    print("KERNEL_OK")
</pallas_src>

<mosaic_0001>
module attributes {stable_mosaic.version = 11 : i64} {
  func.func @_negpearson_kernel(%arg0: i32, %arg1: i32, %arg2: memref<8x128xf32, #tpu.memory_space<vmem>>, %arg3: memref<8x128xf32, #tpu.memory_space<vmem>>, %arg4: memref<8x1xf32, #tpu.memory_space<vmem>>, %arg5: memref<8x128xf32, #tpu.memory_space<vmem>>, %arg6: memref<8x128xf32, #tpu.memory_space<vmem>>, %arg7: memref<8x128xf32, #tpu.memory_space<vmem>>, %arg8: memref<8x128xf32, #tpu.memory_space<vmem>>, %arg9: memref<8x128xf32, #tpu.memory_space<vmem>>, %arg10: memref<8x1xf32, #tpu.memory_space<vmem>>, %arg11: memref<8x1xf32, #tpu.memory_space<vmem>>) attributes {dimension_semantics = [#tpu.dimension_semantics<parallel>, #tpu.dimension_semantics<arbitrary>], iteration_bounds = array<i64: 2, 1>, scalar_prefetch = 0 : i64, scratch_operands = 7 : i64, tpu.core_type = #tpu.core_type<tc>, window_params = [{transform_indices = @transform_0, window_bounds = array<i64: 8, 128>}, {transform_indices = @transform_1, window_bounds = array<i64: 8, 128>}, {transform_indices = @transform_2, window_bounds = array<i64: 8, 1>}]} {
    %c0_i32 = arith.constant 0 : i32
    %0 = arith.cmpi eq, %arg1, %c0_i32 : i32
    %1 = arith.extui %0 : i1 to i32
    %c0_i32_0 = arith.constant 0 : i32
    %2 = arith.cmpi ne, %1, %c0_i32_0 : i32
    scf.if %2 {
      %cst = arith.constant 0.000000e+00 : f32
      %34 = vector.broadcast %cst : f32 to vector<8x128xf32>
      %c0_30 = arith.constant 0 : index
      %c0_31 = arith.constant 0 : index
      %35 = vector.load %arg5[%c0_30, %c0_31] : memref<8x128xf32, #tpu.memory_space<vmem>>, vector<8x128xf32>
      tpu.vector_store %arg5[%c0_30, %c0_31], %34 {strides = array<i32>} : memref<8x128xf32, #tpu.memory_space<vmem>>, vector<8x128xf32>,
      %cst_32 = arith.constant 0.000000e+00 : f32
      %36 = vector.broadcast %cst_32 : f32 to vector<8x128xf32>
      %c0_33 = arith.constant 0 : index
      %c0_34 = arith.constant 0 : index
      %37 = vector.load %arg6[%c0_33, %c0_34] : memref<8x128xf32, #tpu.memory_space<vmem>>, vector<8x128xf32>
      tpu.vector_store %arg6[%c0_33, %c0_34], %36 {strides = array<i32>} : memref<8x128xf32, #tpu.memory_space<vmem>>, vector<8x128xf32>,
      %cst_35 = arith.constant 0.000000e+00 : f32
      %38 = vector.broadcast %cst_35 : f32 to vector<8x128xf32>
      %c0_36 = arith.constant 0 : index
      %c0_37 = arith.constant 0 : index
      %39 = vector.load %arg7[%c0_36, %c0_37] : memref<8x128xf32, #tpu.memory_space<vmem>>, vector<8x128xf32>
      tpu.vector_store %arg7[%c0_36, %c0_37], %38 {strides = array<i32>} : memref<8x128xf32, #tpu.memory_space<vmem>>, vector<8x128xf32>,
      %cst_38 = arith.constant 0.000000e+00 : f32
      %40 = vector.broadcast %cst_38 : f32 to vector<8x128xf32>
      %c0_39 = arith.constant 0 : index
      %c0_40 = arith.constant 0 : index
      %41 = vector.load %arg8[%c0_39, %c0_40] : memref<8x128xf32, #tpu.memory_space<vmem>>, vector<8x128xf32>
      tpu.vector_store %arg8[%c0_39, %c0_40], %40 {strides = array<i32>} : memref<8x128xf32, #tpu.memory_space<vmem>>, vector<8x128xf32>,
      %cst_41 = arith.constant 0.000000e+00 : f32
      %42 = vector.broadcast %cst_41 : f32 to vector<8x128xf32>
      %c0_42 = arith.constant 0 : index
      %c0_43 = arith.constant 0 : index
      %43 = vector.load %arg9[%c0_42, %c0_43] : memref<8x128xf32, #tpu.memory_space<vmem>>, vector<8x128xf32>
      tpu.vector_store %arg9[%c0_42, %c0_43], %42 {strides = array<i32>} : memref<8x128xf32, #tpu.memory_space<vmem>>, vector<8x128xf32>,
      %c0_44 = arith.constant 0 : index
      %c0_45 = arith.constant 0 : index
      %44 = vector.load %arg2[%c0_44, %c0_45] : memref<8x128xf32, #tpu.memory_space<vmem>>, vector<8x1xf32>
      %c0_46 = arith.constant 0 : index
      %c0_47 = arith.constant 0 : index
      %45 = vector.load %arg10[%c0_46, %c0_47] : memref<8x1xf32, #tpu.memory_space<vmem>>, vector<8x1xf32>
      tpu.vector_store %arg10[%c0_46, %c0_47], %44 {strides = array<i32>} : memref<8x1xf32, #tpu.memory_space<vmem>>, vector<8x1xf32>,
      %c0_48 = arith.constant 0 : index
      %c0_49 = arith.constant 0 : index
      %46 = vector.load %arg3[%c0_48, %c0_49] : memref<8x128xf32, #tpu.memory_space<vmem>>, vector<8x1xf32>
      %c0_50 = arith.constant 0 : index
      %c0_51 = arith.constant 0 : index
      %47 = vector.load %arg11[%c0_50, %c0_51] : memref<8x1xf32, #tpu.memory_space<vmem>>, vector<8x1xf32>
      tpu.vector_store %arg11[%c0_50, %c0_51], %46 {strides = array<i32>} : memref<8x1xf32, #tpu.memory_space<vmem>>, vector<8x1xf32>,
    } else {
    }
    %c0 = arith.constant 0 : index
    %c0_1 = arith.constant 0 : index
    %3 = vector.load %arg10[%c0, %c0_1] : memref<8x1xf32, #tpu.memory_space<vmem>>, vector<8x1xf32>
    %4 = vector.shape_cast %3 : vector<8x1xf32> to vector<8x1xf32>
    %5 = vector.broadcast %4 : vector<8x1xf32> to vector<8x128xf32>
    %c0_2 = arith.constant 0 : index
    %c0_3 = arith.constant 0 : index
    %6 = vector.load %arg11[%c0_2, %c0_3] : memref<8x1xf32, #tpu.memory_space<vmem>>, vector<8x1xf32>
    %7 = vector.shape_cast %6 : vector<8x1xf32> to vector<8x1xf32>
    %8 = vector.broadcast %7 : vector<8x1xf32> to vector<8x128xf32>
    %c0_4 = arith.constant 0 : index
    %c0_5 = arith.constant 0 : index
    %9 = vector.load %arg2[%c0_4, %c0_5] : memref<8x128xf32, #tpu.memory_space<vmem>>, vector<8x128xf32>
    %10 = arith.subf %9, %5 : vector<8x128xf32>
    %c0_6 = arith.constant 0 : index
    %c0_7 = arith.constant 0 : index
    %11 = vector.load %arg3[%c0_6, %c0_7] : memref<8x128xf32, #tpu.memory_space<vmem>>, vector<8x128xf32>
    %12 = arith.subf %11, %8 : vector<8x128xf32>
    %c0_8 = arith.constant 0 : index
    %c0_9 = arith.constant 0 : index
    %13 = vector.load %arg5[%c0_8, %c0_9] : memref<8x128xf32, #tpu.memory_space<vmem>>, vector<8x128xf32>
    %14 = arith.addf %13, %10 : vector<8x128xf32>
    %c0_10 = arith.constant 0 : index
    %c0_11 = arith.constant 0 : index
    %15 = vector.load %arg5[%c0_10, %c0_11] : memref<8x128xf32, #tpu.memory_space<vmem>>, vector<8x128xf32>
    tpu.vector_store %arg5[%c0_10, %c0_11], %14 {strides = array<i32>} : memref<8x128xf32, #tpu.memory_space<vmem>>, vector<8x128xf32>,
    %c0_12 = arith.constant 0 : index
    %c0_13 = arith.constant 0 : index
    %16 = vector.load %arg6[%c0_12, %c0_13] : memref<8x128xf32, #tpu.memory_space<vmem>>, vector<8x128xf32>
    %17 = arith.addf %16, %12 : vector<8x128xf32>
    %c0_14 = arith.constant 0 : index
    %c0_15 = arith.constant 0 : index
    %18 = vector.load %arg6[%c0_14, %c0_15] : memref<8x128xf32, #tpu.memory_space<vmem>>, vector<8x128xf32>
    tpu.vector_store %arg6[%c0_14, %c0_15], %17 {strides = array<i32>} : memref<8x128xf32, #tpu.memory_space<vmem>>, vector<8x128xf32>,
    %c0_16 = arith.constant 0 : index
    %c0_17 = arith.constant 0 : index
    %19 = vector.load %arg7[%c0_16, %c0_17] : memref<8x128xf32, #tpu.memory_space<vmem>>, vector<8x128xf32>
    %20 = arith.mulf %10, %12 : vector<8x128xf32>
    %21 = arith.addf %19, %20 : vector<8x128xf32>
    %c0_18 = arith.constant 0 : index
    %c0_19 = arith.constant 0 : index
    %22 = vector.load %arg7[%c0_18, %c0_19] : memref<8x128xf32, #tpu.memory_space<vmem>>, vector<8x128xf32>
    tpu.vector_store %arg7[%c0_18, %c0_19], %21 {strides = array<i32>} : memref<8x128xf32, #tpu.memory_space<vmem>>, vector<8x128xf32>,
    %c0_20 = arith.constant 0 : index
    %c0_21 = arith.constant 0 : index
    %23 = vector.load %arg8[%c0_20, %c0_21] : memref<8x128xf32, #tpu.memory_space<vmem>>, vector<8x128xf32>
    %24 = arith.mulf %10, %10 : vector<8x128xf32>
    %25 = arith.addf %23, %24 : vector<8x128xf32>
    %c0_22 = arith.constant 0 : index
    %c0_23 = arith.constant 0 : index
    %26 = vector.load %arg8[%c0_22, %c0_23] : memref<8x128xf32, #tpu.memory_space<vmem>>, vector<8x128xf32>
    tpu.vector_store %arg8[%c0_22, %c0_23], %25 {strides = array<i32>} : memref<8x128xf32, #tpu.memory_space<vmem>>, vector<8x128xf32>,
    %c0_24 = arith.constant 0 : index
    %c0_25 = arith.constant 0 : index
    %27 = vector.load %arg9[%c0_24, %c0_25] : memref<8x128xf32, #tpu.memory_space<vmem>>, vector<8x128xf32>
    %28 = arith.mulf %12, %12 : vector<8x128xf32>
    %29 = arith.addf %27, %28 : vector<8x128xf32>
    %c0_26 = arith.constant 0 : index
    %c0_27 = arith.constant 0 : index
    %30 = vector.load %arg9[%c0_26, %c0_27] : memref<8x128xf32, #tpu.memory_space<vmem>>, vector<8x128xf32>
    tpu.vector_store %arg9[%c0_26, %c0_27], %29 {strides = array<i32>} : memref<8x128xf32, #tpu.memory_space<vmem>>, vector<8x128xf32>,
    %c0_i32_28 = arith.constant 0 : i32
    %31 = arith.cmpi eq, %arg1, %c0_i32_28 : i32
    %32 = arith.extui %31 : i1 to i32
    %c0_i32_29 = arith.constant 0 : i32
    %33 = arith.cmpi ne, %32, %c0_i32_29 : i32
    scf.if %33 {
      %c0_30 = arith.constant 0 : index
      %c0_31 = arith.constant 0 : index
      %34 = vector.load %arg5[%c0_30, %c0_31] : memref<8x128xf32, #tpu.memory_space<vmem>>, vector<8x128xf32>
      %cst = arith.constant dense<0.000000e+00> : vector<8xf32>
      %35 = vector.multi_reduction <add>, %34, %cst [1] : vector<8x128xf32> to vector<8xf32>
      %36 = vector.shape_cast %35 : vector<8xf32> to vector<8x1xf32>
      %c0_32 = arith.constant 0 : index
      %c0_33 = arith.constant 0 : index
      %37 = vector.load %arg6[%c0_32, %c0_33] : memref<8x128xf32, #tpu.memory_space<vmem>>, vector<8x128xf32>
      %cst_34 = arith.constant dense<0.000000e+00> : vector<8xf32>
      %38 = vector.multi_reduction <add>, %37, %cst_34 [1] : vector<8x128xf32> to vector<8xf32>
      %39 = vector.shape_cast %38 : vector<8xf32> to vector<8x1xf32>
      %c0_35 = arith.constant 0 : index
      %c0_36 = arith.constant 0 : index
      %40 = vector.load %arg7[%c0_35, %c0_36] : memref<8x128xf32, #tpu.memory_space<vmem>>, vector<8x128xf32>
      %cst_37 = arith.constant dense<0.000000e+00> : vector<8xf32>
      %41 = vector.multi_reduction <add>, %40, %cst_37 [1] : vector<8x128xf32> to vector<8xf32>
      %42 = vector.shape_cast %41 : vector<8xf32> to vector<8x1xf32>
      %c0_38 = arith.constant 0 : index
      %c0_39 = arith.constant 0 : index
      %43 = vector.load %arg8[%c0_38, %c0_39] : memref<8x128xf32, #tpu.memory_space<vmem>>, vector<8x128xf32>
      %cst_40 = arith.constant dense<0.000000e+00> : vector<8xf32>
      %44 = vector.multi_reduction <add>, %43, %cst_40 [1] : vector<8x128xf32> to vector<8xf32>
      %45 = vector.shape_cast %44 : vector<8xf32> to vector<8x1xf32>
      %c0_41 = arith.constant 0 : index
      %c0_42 = arith.constant 0 : index
      %46 = vector.load %arg9[%c0_41, %c0_42] : memref<8x128xf32, #tpu.memory_space<vmem>>, vector<8x128xf32>
      %cst_43 = arith.constant dense<0.000000e+00> : vector<8xf32>
      %47 = vector.multi_reduction <add>, %46, %cst_43 [1] : vector<8x128xf32> to vector<8xf32>
      %48 = vector.shape_cast %47 : vector<8xf32> to vector<8x1xf32>
      %49 = arith.mulf %36, %39 : vector<8x1xf32>
      %cst_44 = arith.constant 7.812500e-03 : f32
      %50 = vector.broadcast %cst_44 : f32 to vector<8x1xf32>
      %51 = arith.mulf %49, %50 : vector<8x1xf32>
      %52 = arith.subf %42, %51 : vector<8x1xf32>
      %53 = arith.mulf %36, %36 : vector<8x1xf32>
      %cst_45 = arith.constant 7.812500e-03 : f32
      %54 = vector.broadcast %cst_45 : f32 to vector<8x1xf32>
      %55 = arith.mulf %53, %54 : vector<8x1xf32>
      %56 = arith.subf %45, %55 : vector<8x1xf32>
      %57 = arith.mulf %39, %39 : vector<8x1xf32>
      %cst_46 = arith.constant 7.812500e-03 : f32
      %58 = vector.broadcast %cst_46 : f32 to vector<8x1xf32>
      %59 = arith.mulf %57, %58 : vector<8x1xf32>
      %60 = arith.subf %48, %59 : vector<8x1xf32>
      %cst_47 = arith.constant 0.000000e+00 : f32
      %61 = vector.broadcast %cst_47 : f32 to vector<8x1xf32>
      %62 = arith.maximumf %56, %61 : vector<8x1xf32>
      %63 = math.sqrt %62 : vector<8x1xf32>
      %cst_48 = arith.constant 9.99999993E-9 : f32
      %64 = vector.broadcast %cst_48 : f32 to vector<8x1xf32>
      %65 = arith.maximumf %63, %64 : vector<8x1xf32>
      %cst_49 = arith.constant 0.000000e+00 : f32
      %66 = vector.broadcast %cst_49 : f32 to vector<8x1xf32>
      %67 = arith.maximumf %60, %66 : vector<8x1xf32>
      %68 = math.sqrt %67 : vector<8x1xf32>
      %cst_50 = arith.constant 9.99999993E-9 : f32
      %69 = vector.broadcast %cst_50 : f32 to vector<8x1xf32>
      %70 = arith.maximumf %68, %69 : vector<8x1xf32>
      %71 = arith.mulf %65, %70 : vector<8x1xf32>
      %72 = arith.divf %52, %71 : vector<8x1xf32>
      %c0_51 = arith.constant 0 : index
      %c0_52 = arith.constant 0 : index
      %73 = vector.load %arg4[%c0_51, %c0_52] : memref<8x1xf32, #tpu.memory_space<vmem>>, vector<8x1xf32>
      tpu.vector_store %arg4[%c0_51, %c0_52], %72 {strides = array<i32>} : memref<8x1xf32, #tpu.memory_space<vmem>>, vector<8x1xf32>,
    } else {
    }
    return
  }
  func.func @transform_0(%arg0: i32, %arg1: i32) -> (i32, i32) {
    %c0_i32 = arith.constant 0 : i32
    return %arg0, %arg1 : i32, i32
  }
  func.func @transform_1(%arg0: i32, %arg1: i32) -> (i32, i32) {
    %c0_i32 = arith.constant 0 : i32
    return %arg0, %arg1 : i32, i32
  }
  func.func @transform_2(%arg0: i32, %arg1: i32) -> (i32, i32) {
    %c0_i32 = arith.constant 0 : i32
    %c0_i32_0 = arith.constant 0 : i32
    return %arg0, %c0_i32 : i32, i32
  }
}

</mosaic_0001>

<llo_original>
// kernel: tpu_custom_call.1
$region0: #{tpu_custom_call.1}
  #allocation0 [shape = 'u32[]', space=smem, size = 0x4, offset = 0x4, fixed_abs, tag = 'smem constant byte address 0x4 - core index']
  #allocation1 [shape = 'u32[144,128]{1,0:T(1,128)}', space=vmem, size = 0x12000, scoped, tag = 'internal scratch']
  #allocation2 [shape = 'f32[8,128]{1,0:T(8,128)}', space=vmem, size = 0x1000, scoped, tag = 'scratch operand']
  #allocation3 [shape = 'f32[8,128]{1,0:T(8,128)}', space=vmem, size = 0x1000, scoped, tag = 'scratch operand']
  #allocation4 [shape = 'f32[8,128]{1,0:T(8,128)}', space=vmem, size = 0x1000, scoped, tag = 'scratch operand']
  #allocation5 [shape = 'f32[8,128]{1,0:T(8,128)}', space=vmem, size = 0x1000, scoped, tag = 'scratch operand']
  #allocation6 [shape = 'f32[8,128]{1,0:T(8,128)}', space=vmem, size = 0x1000, scoped, tag = 'scratch operand']
  #allocation7 [shape = 'f32[8,1]{1,0:T(8,128)}', space=vmem, size = 0x1000, scoped, tag = 'scratch operand']
  #allocation8 [shape = 'f32[8,1]{1,0:T(8,128)}', space=vmem, size = 0x1000, scoped, tag = 'scratch operand']
  %s0 = inlined_call_operand.hbm [shape: f32[16,128], index: 0, kind: input, shape index: {}]
  %s1 = inlined_call_operand.hbm [shape: f32[16,128], index: 1, kind: input, shape index: {}]
  %s2 = inlined_call_operand.vmem [shape: f32[16,1], index: 2, kind: output, shape index: {}]
  %s3 = sld [smem:[#allocation0]]
  $region57: #{tpu_custom_call.1} parent=0
    _
  %s5 = ssub.s32 1, %s3
  %s6 = scalar_select 0, %s5, %s3
  $region1: #{tpu_custom_call.1} parent=0
    #allocation9 [shape = 'u8[8192]{0}', space=vmem, size = 0x2000, scoped, tag = 'input window, operand 0']
    #allocation10 [shape = 's32[2]{0}', space=sflag, size = 0x8, scoped, tag = 'scoped memory for tpu_custom_call.1']
    #allocation11 [shape = 'u8[8192]{0}', space=vmem, size = 0x2000, scoped, tag = 'input window, operand 1']
    #allocation12 [shape = 's32[2]{0}', space=sflag, size = 0x8, scoped, tag = 'scoped memory for tpu_custom_call.1']
    %7 = vsyncpa [#allocation10], 0
    %s8 = scalar_lea.sflag [#allocation10], 1
    %9 = vsyncpa %s8, 0
    %10 = vsyncpa [#allocation12], 0
    %s11 = scalar_lea.sflag [#allocation12], 1
    %12 = vsyncpa %s11, 0
    loop: start=0, step=1, limit=4
    $region2: #{tpu_custom_call.1} parent=1 // loop_pre_header
      _
    $region3: #{tpu_custom_call.1} parent=1 // loop_header
      %s14 = sphi 0, %s18
      %p15 = scmp.ge.s32.totalorder %s14, 4
      %s21 = sphi 0, %s33
      %s22 = sphi 0, %s29
      %s23 = sphi 0, %s21
      %s24 = sphi 0, %s22
      %s25 = sphi 0, %s23
      %s26 = sphi 0, %s24
      %s38 = sphi 0, %s40
      %s41 = sphi 0, %s38
      %s42 = sphi 0, %s41
      %s58 = sphi 0, %s42
      %s66 = sphi 0, %s68
      %s69 = sphi 0, %s66
      %s70 = sphi 0, %s69
      %s86 = sphi 0, %s70
      %s92 = sphi 0, %s94
      %s95 = sphi 0, %s92
      %s96 = sphi 0, %s95
      %s112 = sphi 0, %s96
    $region4: #{tpu_custom_call.1} parent=1 // loop_header_branch
      %17 = sbr.rel (%p15) target = $region8
    $region5: #{tpu_custom_call.1} parent=1 // loop_body
      %s19 = ssub.s32 %s14, 1
      %s20 = ssub.s32 %s14, 2
      %s27 = sadd.s32 1, %s22
      %p28 = scmp.ge.s32.totalorder %s27, 1
      %s29 = scalar_select %p28, 0, %s27
      %s30 = sadd.s32 1, %s21
      %s31 = scalar_select %p28, %s30, %s21
      %p32 = scmp.ge.s32.totalorder %s31, 2
      %s33 = scalar_select %p32, 0, %s31
      %s34 = ssub.s32 %s21, %s33
      %s35 = ssub.s32 %s22, %s29
      %s36 = sor.u32 %s34, %s35
      %p37 = scmp.eq.s32.totalorder %s36, 0
      %s39 = sadd.s32 %s38, 1
      %s40 = scalar_select %p37, %s38, %s39
      %p43 = pneg %p37
      %p44 = scmp.eq.s32.totalorder %s14, 1
      %p45 = por %p43, %p44
      %p46 = scmp.ne.s32.totalorder %s38, %s41
      %p47 = scmp.eq.s32.totalorder %s14, 0
      %p48 = por %p46, %p47
      %p49 = scmp.ne.s32.totalorder %s38, %s41
      %p50 = scmp.eq.s32.totalorder %s19, 1
      %p51 = por %p49, %p50
      %p52 = scmp.ne.s32.totalorder %s41, %s42
      %p53 = scmp.eq.s32.totalorder %s19, 0
      %p54 = por %p52, %p53
      %p55 = scmp.ne.s32.totalorder %s41, %s42
      %p56 = scmp.eq.s32.totalorder %s20, 1
      %p57 = por %p55, %p56
      %p59 = scmp.ne.s32.totalorder %s42, %s58
      %p60 = scmp.eq.s32.totalorder %s20, 0
      %p61 = por %p59, %p60
      %s62 = ssub.s32 %s21, %s33
      %s63 = ssub.s32 %s22, %s29
      %s64 = sor.u32 %s62, %s63
      %p65 = scmp.eq.s32.totalorder %s64, 0
      %s67 = sadd.s32 %s66, 1
      %s68 = scalar_select %p65, %s66, %s67
      %p71 = pneg %p65
      %p72 = scmp.eq.s32.totalorder %s14, 1
      %p73 = por %p71, %p72
      %p74 = scmp.ne.s32.totalorder %s66, %s69
      %p75 = scmp.eq.s32.totalorder %s14, 0
      %p76 = por %p74, %p75
      %p77 = scmp.ne.s32.totalorder %s66, %s69
      %p78 = scmp.eq.s32.totalorder %s19, 1
      %p79 = por %p77, %p78
      %p80 = scmp.ne.s32.totalorder %s69, %s70
      %p81 = scmp.eq.s32.totalorder %s19, 0
      %p82 = por %p80, %p81
      %p83 = scmp.ne.s32.totalorder %s69, %s70
      %p84 = scmp.eq.s32.totalorder %s20, 1
      %p85 = por %p83, %p84
      %p87 = scmp.ne.s32.totalorder %s70, %s86
      %p88 = scmp.eq.s32.totalorder %s20, 0
      %p89 = por %p87, %p88
      %s90 = ssub.s32 %s21, %s33
      %p91 = scmp.eq.s32.totalorder %s90, 0
      %s93 = sadd.s32 %s92, 1
      %s94 = scalar_select %p91, %s92, %s93
      %p97 = pneg %p91
      %p98 = scmp.eq.s32.totalorder %s14, 1
      %p99 = por %p97, %p98
      %p100 = scmp.ne.s32.totalorder %s92, %s95
      %p101 = scmp.eq.s32.totalorder %s14, 0
      %p102 = por %p100, %p101
      %p103 = scmp.ne.s32.totalorder %s92, %s95
      %p104 = scmp.eq.s32.totalorder %s19, 1
      %p105 = por %p103, %p104
      %p106 = scmp.ne.s32.totalorder %s95, %s96
      %p107 = scmp.eq.s32.totalorder %s19, 0
      %p108 = por %p106, %p107
      %p109 = scmp.ne.s32.totalorder %s95, %s96
      %p110 = scmp.eq.s32.totalorder %s20, 1
      %p111 = por %p109, %p110
      %p113 = scmp.ne.s32.totalorder %s96, %s112
      %p114 = scmp.eq.s32.totalorder %s20, 0
      %p115 = por %p113, %p114
      %p116 = scmp.le.s32.totalorder 1, %s14
      %p117 = scmp.lt.s32.totalorder %s14, 3
      %p118 = pnand %p116, %p117
      %p119 = pneg %p118
      // Predicated region
      $region9: #{tpu_custom_call.1} parent=5 // pred_check
        _
      $region10: #{tpu_custom_call.1} parent=5 // pred_check_branch
        %121 = sbr.rel (%p118) target = $region12
      $region11: #{tpu_custom_call.1} parent=5 // pred_region
        %s122 = ssub.s32 %s14, 1
      $region12: #{tpu_custom_call.1} parent=5 // pred_fallthru
        _
      %p123 = scmp.lt.s32.totalorder %s14, 2
      // Predicated region
      $region13: #{tpu_custom_call.1} parent=5 // pred_check
        %p124 = pneg %p123
      $region14: #{tpu_custom_call.1} parent=5 // pred_check_branch
        %126 = sbr.rel (%p124) target = $region16
      $region15: #{tpu_custom_call.1} parent=5 // pred_region
        // Predicated region
        $region17: #{tpu_custom_call.1} parent=15 // pred_check
          %p127 = pneg %p48
        $region18: #{tpu_custom_call.1} parent=15 // pred_check_branch
          %129 = sbr.rel (%p127) target = $region20
        $region19: #{tpu_custom_call.1} parent=15 // pred_region
          %s130 = sand.u32 %s38, 1
          %s131 = scalar_lea.sflag [#allocation10], %s130
          %s132 = sand.u32 %s38, 1
          %s133 = smul.addr %s132, 8
          %s134 = scalar_lea.vmem [#allocation9], %s133
          %s136 = ssub.s32 128, 128
          %137 = vsyncadd %s131, %s136
          %s138 = sadd.s32 %s22, %s21
          %s139 = smul.addr %s138, 128
          %s140 = scalar_lea.hbm %s0, %s139
          %s142 = sshll.u32 %s134, 4
          %s143 = int_to_ptr.vmem [resolvable:$true] %s142
          %145 = dma.hbm_to_vmem [thread:$0]  %s140, 128, %s143, %s131
        $region20: #{tpu_custom_call.1} parent=15 // pred_fallthru
          _
        // Predicated region
        $region21: #{tpu_custom_call.1} parent=15 // pred_check
          %p146 = pneg %p76
        $region22: #{tpu_custom_call.1} parent=15 // pred_check_branch
          %148 = sbr.rel (%p146) target = $region24
        $region23: #{tpu_custom_call.1} parent=15 // pred_region
          %s149 = sand.u32 %s66, 1
          %s150 = scalar_lea.sflag [#allocation12], %s149
          %s151 = sand.u32 %s66, 1
          %s152 = smul.addr %s151, 8
          %s153 = scalar_lea.vmem [#allocation11], %s152
          %s155 = ssub.s32 128, 128
          %156 = vsyncadd %s150, %s155
          %s157 = sadd.s32 %s22, %s21
          %s158 = smul.addr %s157, 128
          %s159 = scalar_lea.hbm %s1, %s158
          %s161 = sshll.u32 %s153, 4
          %s162 = int_to_ptr.vmem [resolvable:$true] %s161
          %164 = dma.hbm_to_vmem [thread:$0]  %s159, 128, %s162, %s150
        $region24: #{tpu_custom_call.1} parent=15 // pred_fallthru
          _
      $region16: #{tpu_custom_call.1} parent=5 // pred_fallthru
        _
      %p165 = scmp.le.s32.totalorder 1, %s14
      %p166 = scmp.lt.s32.totalorder %s14, 3
      %p167 = pnand %p165, %p166
      %p168 = pneg %p167
      // Predicated region
      $region25: #{tpu_custom_call.1} parent=5 // pred_check
        _
      $region26: #{tpu_custom_call.1} parent=5 // pred_check_branch
        %170 = sbr.rel (%p167) target = $region28
      $region27: #{tpu_custom_call.1} parent=5 // pred_region
        %s171 = ssub.s32 %s14, 1
        %s172 = sand.u32 %s41, 1
        %s173 = scalar_lea.sflag [#allocation10], %s172
        %s174 = sand.u32 %s41, 1
        %s175 = smul.addr %s174, 8
        %s176 = scalar_lea.vmem [#allocation9], %s175
        // Predicated region
        $region29: #{tpu_custom_call.1} parent=27 // pred_check
          %p177 = pneg %p54
        $region30: #{tpu_custom_call.1} parent=27 // pred_check_branch
          %179 = sbr.rel (%p177) target = $region32
        $region31: #{tpu_custom_call.1} parent=27 // pred_region
          %180 = dma.done %s173, 128
        $region32: #{tpu_custom_call.1} parent=27 // pred_fallthru
          _
        %s181 = sand.u32 %s69, 1
        %s182 = scalar_lea.sflag [#allocation12], %s181
        %s183 = sand.u32 %s69, 1
        %s184 = smul.addr %s183, 8
        %s185 = scalar_lea.vmem [#allocation11], %s184
        // Predicated region
        $region33: #{tpu_custom_call.1} parent=27 // pred_check
          %p186 = pneg %p82
        $region34: #{tpu_custom_call.1} parent=27 // pred_check_branch
          %188 = sbr.rel (%p186) target = $region36
        $region35: #{tpu_custom_call.1} parent=27 // pred_region
          %189 = dma.done %s182, 128
        $region36: #{tpu_custom_call.1} parent=27 // pred_fallthru
          _
        %s190 = sand.u32 %s41, 1
        %s191 = scalar_lea.sflag [#allocation10], %s190
        %s192 = sand.u32 %s41, 1
        %s193 = smul.addr %s192, 8
        %s194 = scalar_lea.vmem [#allocation9], %s193
        %p195 = pneg %p54
        %p196 = pneg %p51
        %s197 = sand.u32 %s69, 1
        %s198 = scalar_lea.sflag [#allocation12], %s197
        %s199 = sand.u32 %s69, 1
        %s200 = smul.addr %s199, 8
        %s201 = scalar_lea.vmem [#allocation11], %s200
        %p202 = pneg %p82
        %p203 = pneg %p79
        %p204 = pneg %p108
        %p205 = pneg %p105
        %p206 = scmp.lt.s32.totalorder %s23, 1
        %s207 = scalar_select %p206, %s23, 1
        %s208 = smul.addr %s207, 8
        %s209 = scalar_lea.vmem %s2, %s208
        %p210 = scmp.lt.s32.totalorder %s23, 1
        %s211 = scalar_select %p210, %s23, 1
        %s212 = smul.addr %s211, 8
        %s213 = scalar_lea.vmem %s2, %s212
        %p214 = scmp.eq.s32.totalorder %s24, 0
        // Predicated region
        $region37: #{tpu_custom_call.1} parent=27 // pred_check
          %p215 = pneg %p214
        $region38: #{tpu_custom_call.1} parent=27 // pred_check_branch
          %217 = sbr.rel (%p215) target = $region40
        $region39: #{tpu_custom_call.1} parent=27 // pred_region
          %218 = vst [vmem:[#allocation2] sm:$0xff] 0.0
          %219 = vst [vmem:[#allocation3] sm:$0xff] 0.0
          %220 = vst [vmem:[#allocation4] sm:$0xff] 0.0
          %221 = vst [vmem:[#allocation5] sm:$0xff] 0.0
          %222 = vst [vmem:[#allocation6] sm:$0xff] 0.0
          %v223 = vld [vmem:[%s176] sm:$0xff]
          %vm224 = vcmask 7168
          %225 = vst.msk [vmem:[#allocation7] sm:$0xff] %vm224, %v223
          %v226 = vld [vmem:[%s185] sm:$0xff]
          %227 = vst.msk [vmem:[#allocation8] sm:$0xff] %vm224, %v226
        $region40: #{tpu_custom_call.1} parent=27 // pred_fallthru
          _
        %v228 = vld [vmem:[#allocation7] sm:$0xff]
        %230 = vset.pattern.permute.xlu0 0
        %231 = vperm.xlu0 %230, %v228
        %v232 = vpop.permute.xlu0 %231
        %v234 = vld [vmem:[#allocation8] sm:$0xff]
        %236 = vset.pattern.permute.xlu0 0
        %237 = vperm.xlu0 %236, %v234
        %v238 = vpop.permute.xlu0 %237
        %v240 = vld [vmem:[%s176] sm:$0xff]
        %v241 = vsub.f32 %v240, %v232
        %v242 = vld [vmem:[%s185] sm:$0xff]
        %v243 = vsub.f32 %v242, %v238
        %v244 = vld [vmem:[#allocation2] sm:$0xff]
        %v245 = vadd.f32 %v244, %v241
        %246 = vst [vmem:[#allocation2] sm:$0xff] %v245
        %v247 = vld [vmem:[#allocation3] sm:$0xff]
        %v248 = vadd.f32 %v247, %v243
        %249 = vst [vmem:[#allocation3] sm:$0xff] %v248
        %v250 = vld [vmem:[#allocation4] sm:$0xff]
        %v251 = vmul.f32 %v241, %v243
        %v252 = vadd.f32 %v250, %v251
        %253 = vst [vmem:[#allocation4] sm:$0xff] %v252
        %v254 = vld [vmem:[#allocation5] sm:$0xff]
        %v255 = vmul.f32 %v241, %v241
        %v256 = vadd.f32 %v254, %v255
        %257 = vst [vmem:[#allocation5] sm:$0xff] %v256
        %v258 = vld [vmem:[#allocation6] sm:$0xff]
        %v259 = vmul.f32 %v243, %v243
        %v260 = vadd.f32 %v258, %v259
        %261 = vst [vmem:[#allocation6] sm:$0xff] %v260
        // Predicated region
        $region41: #{tpu_custom_call.1} parent=27 // pred_check
          %p262 = pneg %p214
        $region42: #{tpu_custom_call.1} parent=27 // pred_check_branch
          %264 = sbr.rel (%p262) target = $region44
        $region43: #{tpu_custom_call.1} parent=27 // pred_region
          %v265 = vld [vmem:[#allocation2] sm:$0xff]
          %266 = vadd.xlane.f32.xlu0 %v265
          %v267 = vpop.xlane.xlu0 %266
          %v268 = vld [vmem:[#allocation3] sm:$0xff]
          %269 = vadd.xlane.f32.xlu0 %v268
          %v270 = vpop.xlane.xlu0 %269
          %v271 = vld [vmem:[#allocation4] sm:$0xff]
          %272 = vadd.xlane.f32.xlu0 %v271
          %v273 = vpop.xlane.xlu0 %272
          %v274 = vld [vmem:[#allocation5] sm:$0xff]
          %275 = vadd.xlane.f32.xlu0 %v274
          %v276 = vpop.xlane.xlu0 %275
          %v277 = vld [vmem:[#allocation6] sm:$0xff]
          %278 = vadd.xlane.f32.xlu0 %v277
          %v279 = vpop.xlane.xlu0 %278
          %v280 = vmul.f32 %v267, %v270
          %v281 = vmul.f32 %v280, 0.0078125
          %v282 = vsub.f32 %v273, %v281
          %v283 = vmul.f32 %v267, %v267
          %v284 = vmul.f32 %v283, 0.0078125
          %v285 = vsub.f32 %v276, %v284
          %v286 = vmul.f32 %v270, %v270
          %v287 = vmul.f32 %v286, 0.0078125
          %v288 = vsub.f32 %v279, %v287
          %v289 = vmax.f32 %v285, 0.0
          %v290 = vrsqrt.pop %v289
          %v291 = vmul.f32 %v289, %v290
          %vm292 = vcmp.eq.f32.partialorder %v289, inf
          %v293 = vsel %vm292, %v289, %v291
          %vm294 = vcmp.eq.f32.partialorder %v289, 0.0
          %v295 = vand.u32 %v289, 2147483648
          %v296 = vsel %vm294, %v295, %v293
          %v297 = vmax.f32 %v296, 1e-08
          %v298 = vmax.f32 %v288, 0.0
          %v299 = vrsqrt.pop %v298
          %v300 = vmul.f32 %v298, %v299
          %vm301 = vcmp.eq.f32.partialorder %v298, inf
          %v302 = vsel %vm301, %v298, %v300
          %vm303 = vcmp.eq.f32.partialorder %v298, 0.0
          %v304 = vand.u32 %v298, 2147483648
          %v305 = vsel %vm303, %v304, %v302
          %v306 = vmax.f32 %v305, 1e-08
          %v307 = vmul.f32 %v297, %v306
          %v308 = vrcp.pop %v307
          %v309 = vmul.f32 %v282, %v308
          %vm310 = vcmask 7168
          %311 = vst.msk [vmem:[%s213] sm:$0xff] %vm310, %v309
        $region44: #{tpu_custom_call.1} parent=27 // pred_fallthru
          _
        %p312 = scmp.lt.s32.totalorder %s23, 1
        %s313 = scalar_select %p312, %s23, 1
        %s314 = smul.addr %s313, 8
        %s315 = scalar_lea.vmem %s2, %s314
        // Predicated region
        $region45: #{tpu_custom_call.1} parent=27 // pred_check
          %p316 = pneg %p105
        $region46: #{tpu_custom_call.1} parent=27 // pred_check_branch
          %318 = sbr.rel (%p316) target = $region48
        $region47: #{tpu_custom_call.1} parent=27 // pred_region
          _
        $region48: #{tpu_custom_call.1} parent=27 // pred_fallthru
          _
      $region28: #{tpu_custom_call.1} parent=5 // pred_fallthru
        _
      %p319 = scmp.le.s32.totalorder 2, %s14
      // Predicated region
      $region49: #{tpu_custom_call.1} parent=5 // pred_check
        %p320 = pneg %p319
      $region50: #{tpu_custom_call.1} parent=5 // pred_check_branch
        %322 = sbr.rel (%p320) target = $region52
      $region51: #{tpu_custom_call.1} parent=5 // pred_region
        %s323 = ssub.s32 %s14, 2
        // Predicated region
        $region53: #{tpu_custom_call.1} parent=51 // pred_check
          %p324 = pneg %p111
        $region54: #{tpu_custom_call.1} parent=51 // pred_check_branch
          %326 = sbr.rel (%p324) target = $region56
        $region55: #{tpu_custom_call.1} parent=51 // pred_region
          %p327 = scmp.lt.s32.totalorder %s25, 1
          %s328 = scalar_select %p327, %s25, 1
          %s329 = smul.addr %s328, 8
          %s330 = scalar_lea.vmem %s2, %s329
        $region56: #{tpu_custom_call.1} parent=51 // pred_fallthru
          _
      $region52: #{tpu_custom_call.1} parent=5 // pred_fallthru
        _
    $region6: #{tpu_custom_call.1} parent=1 // loop_footer
      %s18 = sadd.s32 1, %s14
    $region7: #{tpu_custom_call.1} parent=1 // loop_footer_branch
      %13 = sbr.rel target = $region3
    $region8: #{tpu_custom_call.1} parent=1 // loop_exit
      _
    %331 = vsyncpa [#allocation10], 1
    %s332 = scalar_lea.sflag [#allocation10], 1
    %333 = vsyncpa %s332, 1
    %334 = vsyncpa [#allocation12], 1
    %s335 = scalar_lea.sflag [#allocation12], 1
    %336 = vsyncpa %s335, 1

</llo_original>
